<compile_context>
chip_gen: v6e
topology: v6e:2x2x1
jax: 0.10.0
libtpu: 0.0.40
codegen_flags: <defaults>
</compile_context>

<pallas_src>
import functools

import jax
import jax.numpy as jnp
from jax.experimental import pallas as pl
from jax.experimental.pallas import tpu as pltpu

_WIDTH = 128                 # lane width: every feature dim padded to 128 lanes
_W_ROWS = 3 * _WIDTH         # three (128, 128) weight blocks stacked
_B_ROW1 = _W_ROWS            # bias rows live right after the weight blocks
_B_ROW2 = _W_ROWS + 1
_B_ROW3 = _W_ROWS + 2
_SLAB_ROWS = _W_ROWS + 8     # round bias rows up to a full 8-sublane group


def _mlp_kernel(x_ref, p_ref, o_ref):
    x = x_ref[...]                                    # (tile_b, 128), zero-padded
    # Static slices of the single resident parameter slab (already in VMEM).
    w1 = p_ref[0 * _WIDTH:1 * _WIDTH, :]              # (128, 128), w1.T zero-padded
    w2 = p_ref[1 * _WIDTH:2 * _WIDTH, :]
    w3 = p_ref[2 * _WIDTH:3 * _WIDTH, :]
    b1 = p_ref[_B_ROW1:_B_ROW1 + 1, :]                # (1, 128)
    b2 = p_ref[_B_ROW2:_B_ROW2 + 1, :]
    b3 = p_ref[_B_ROW3:_B_ROW3 + 1, :]

    h1 = jnp.maximum(jnp.dot(x, w1, preferred_element_type=jnp.float32) + b1, 0.0)
    h2 = jnp.maximum(jnp.dot(h1, w2, preferred_element_type=jnp.float32) + b2, 0.0)
    o = jnp.dot(h2, w3, preferred_element_type=jnp.float32) + b3
    o_ref[...] = o.astype(o_ref.dtype)                # lane-dense (tile_b, 128) store


def prepare_params(w1, b1, w2, b2, w3, b3):
    """ONE-TIME packing of PyTorch-layout params into a single lane-padded slab.

    wN: (out, in) torch nn.Linear layout, bN: (out,). Returns f32 (_SLAB_ROWS, 128)
    with wN.T in the top-left of block N and biases as single rows. Zero padding
    guarantees padded lanes stay exactly zero through the whole forward pass.
    """
    slab = jnp.zeros((_SLAB_ROWS, _WIDTH), jnp.float32)
    for row0, w in ((0, w1), (_WIDTH, w2), (2 * _WIDTH, w3)):
        wt = jnp.asarray(w, jnp.float32).T            # (in, out)
        slab = slab.at[row0:row0 + wt.shape[0], :wt.shape[1]].set(wt)
    for row, b in ((_B_ROW1, b1), (_B_ROW2, b2), (_B_ROW3, b3)):
        b = jnp.asarray(b, jnp.float32)
        slab = slab.at[row, :b.shape[0]].set(b)
    return slab


@functools.partial(jax.jit, static_argnames=("out_size", "tile_b"))
def simple_nn_forward(x, params, *, out_size, tile_b=256):
    """x: (B, input_size) f32. params: slab from prepare_params(). -> (B, out_size)."""
    B, in_size = x.shape
    b_pad = -(-B // 8) * 8                      # sublane multiple
    block_b = min(tile_b, b_pad)                # batch tile per grid step
    b_pad = -(-b_pad // block_b) * block_b      # grid divides evenly
    grid_b = b_pad // block_b

    # Per-call padding of the activation to a vreg-friendly (b_pad, 128) slab.
    x_pad = jnp.zeros((b_pad, _WIDTH), jnp.float32).at[:B, :in_size].set(
        x.astype(jnp.float32))

    flops = 2 * b_pad * _WIDTH * _WIDTH * 3
    bytes_accessed = 4 * (x_pad.size + params.size + b_pad * _WIDTH)

    out_pad = pl.pallas_call(
        _mlp_kernel,
        out_shape=jax.ShapeDtypeStruct((b_pad, _WIDTH), jnp.float32),
        grid=(grid_b,),
        in_specs=[
            pl.BlockSpec((block_b, _WIDTH), lambda i: (i, 0)),        # x tiles
            pl.BlockSpec((_SLAB_ROWS, _WIDTH), lambda i: (0, 0)),     # resident params
        ],
        out_specs=pl.BlockSpec((block_b, _WIDTH), lambda i: (i, 0)),
        compiler_params=pltpu.CompilerParams(
            dimension_semantics=("parallel",)),       # megacore-shardable batch axis
        cost_estimate=pl.CostEstimate(
            flops=flops, transcendentals=0, bytes_accessed=bytes_accessed),
    )(x_pad, params)

    return out_pad[:B, :out_size]


def _init_linear(key, in_features, out_features):
    # Deterministic init mimicking torch.nn.Linear's U(-1/sqrt(in), 1/sqrt(in)).
    kw, kb = jax.random.split(key)
    bound = 1.0 / jnp.sqrt(jnp.float32(in_features))
    w = jax.random.uniform(kw, (out_features, in_features), jnp.float32,
                           minval=-bound, maxval=bound)
    b = jax.random.uniform(kb, (out_features,), jnp.float32,
                           minval=-bound, maxval=bound)
    return w, b


if __name__ == "__main__":
    # Shapes implied by the script: x is (10, 2) -> input_size = 2.
    batch = 10
    input_size, lower_hidden, upper_hidden, output_size = 2, 32, 16, 4

    key = jax.random.PRNGKey(0)
    kx, k1, k2, k3 = jax.random.split(key, 4)

    x = jax.random.uniform(kx, (batch, input_size), jnp.float32,
                           minval=-1.0, maxval=1.0)
    w1, b1 = _init_linear(k1, input_size, lower_hidden)
    w2, b2 = _init_linear(k2, lower_hidden, upper_hidden)
    w3, b3 = _init_linear(k3, upper_hidden, output_size)

    # One-time parameter packing (outside the per-call hot path).
    params = prepare_params(w1, b1, w2, b2, w3, b3)

    out = simple_nn_forward(x, params, out_size=output_size)
    out = jax.block_until_ready(out)

    # Pure-JAX reference of the same forward semantics.
    h1 = jnp.maximum(x @ w1.T + b1, 0.0)
    h2 = jnp.maximum(h1 @ w2.T + b2, 0.0)
    ref = h2 @ w3.T + b3
    assert out.shape == (batch, output_size)
    assert jnp.allclose(out, ref, atol=1e-5, rtol=1e-5)

    print("KERNEL_OK")
</pallas_src>

<mosaic_0001>
module attributes {stable_mosaic.version = 11 : i64} {
  func.func @_mlp_kernel(%arg0: i32, %arg1: memref<16x128xf32, #tpu.memory_space<vmem>>, %arg2: memref<392x128xf32, #tpu.memory_space<vmem>>, %arg3: memref<16x128xf32, #tpu.memory_space<vmem>>) attributes {dimension_semantics = [#tpu.dimension_semantics<parallel>], iteration_bounds = array<i64: 1>, scalar_prefetch = 0 : i64, scratch_operands = 0 : i64, tpu.core_type = #tpu.core_type<tc>, window_params = [{transform_indices = @transform_0, window_bounds = array<i64: 16, 128>}, {pipeline_mode = #tpu.pipeline_mode<synchronous>, transform_indices = @transform_1, window_bounds = array<i64: 392, 128>}, {transform_indices = @transform_2, window_bounds = array<i64: 16, 128>}]} {
    %c0 = arith.constant 0 : index
    %c0_0 = arith.constant 0 : index
    %0 = vector.load %arg1[%c0, %c0_0] : memref<16x128xf32, #tpu.memory_space<vmem>>, vector<16x128xf32>
    %c0_1 = arith.constant 0 : index
    %c0_2 = arith.constant 0 : index
    %1 = vector.load %arg2[%c0_1, %c0_2] : memref<392x128xf32, #tpu.memory_space<vmem>>, vector<128x128xf32>
    %c128 = arith.constant 128 : index
    %c0_3 = arith.constant 0 : index
    %2 = vector.load %arg2[%c128, %c0_3] : memref<392x128xf32, #tpu.memory_space<vmem>>, vector<128x128xf32>
    %c256 = arith.constant 256 : index
    %c0_4 = arith.constant 0 : index
    %3 = vector.load %arg2[%c256, %c0_4] : memref<392x128xf32, #tpu.memory_space<vmem>>, vector<128x128xf32>
    %c384 = arith.constant 384 : index
    %c0_5 = arith.constant 0 : index
    %4 = vector.load %arg2[%c384, %c0_5] : memref<392x128xf32, #tpu.memory_space<vmem>>, vector<1x128xf32>
    %c385 = arith.constant 385 : index
    %c0_6 = arith.constant 0 : index
    %5 = vector.load %arg2[%c385, %c0_6] : memref<392x128xf32, #tpu.memory_space<vmem>>, vector<1x128xf32>
    %c386 = arith.constant 386 : index
    %c0_7 = arith.constant 0 : index
    %6 = vector.load %arg2[%c386, %c0_7] : memref<392x128xf32, #tpu.memory_space<vmem>>, vector<1x128xf32>
    %cst = arith.constant dense<0.000000e+00> : vector<16x128xf32>
    %7 = tpu.matmul %0, %1, %cst {dimension_numbers = #tpu.dot_dimension_numbers<[1], [0], [0], [1], [0, 0, 1, 1], [], []>} : vector<16x128xf32>, vector<128x128xf32>, vector<16x128xf32> -> vector<16x128xf32>
    %8 = vector.broadcast %4 : vector<1x128xf32> to vector<16x128xf32>
    %9 = arith.addf %7, %8 : vector<16x128xf32>
    %cst_8 = arith.constant 0.000000e+00 : f32
    %10 = vector.broadcast %cst_8 : f32 to vector<16x128xf32>
    %11 = arith.maximumf %9, %10 : vector<16x128xf32>
    %cst_9 = arith.constant dense<0.000000e+00> : vector<16x128xf32>
    %12 = tpu.matmul %11, %2, %cst_9 {dimension_numbers = #tpu.dot_dimension_numbers<[1], [0], [0], [1], [0, 0, 1, 1], [], []>} : vector<16x128xf32>, vector<128x128xf32>, vector<16x128xf32> -> vector<16x128xf32>
    %13 = vector.broadcast %5 : vector<1x128xf32> to vector<16x128xf32>
    %14 = arith.addf %12, %13 : vector<16x128xf32>
    %cst_10 = arith.constant 0.000000e+00 : f32
    %15 = vector.broadcast %cst_10 : f32 to vector<16x128xf32>
    %16 = arith.maximumf %14, %15 : vector<16x128xf32>
    %cst_11 = arith.constant dense<0.000000e+00> : vector<16x128xf32>
    %17 = tpu.matmul %16, %3, %cst_11 {dimension_numbers = #tpu.dot_dimension_numbers<[1], [0], [0], [1], [0, 0, 1, 1], [], []>} : vector<16x128xf32>, vector<128x128xf32>, vector<16x128xf32> -> vector<16x128xf32>
    %18 = vector.broadcast %6 : vector<1x128xf32> to vector<16x128xf32>
    %19 = arith.addf %17, %18 : vector<16x128xf32>
    %c0_12 = arith.constant 0 : index
    %c0_13 = arith.constant 0 : index
    %20 = vector.load %arg3[%c0_12, %c0_13] : memref<16x128xf32, #tpu.memory_space<vmem>>, vector<16x128xf32>
    tpu.vector_store %arg3[%c0_12, %c0_13], %19 {strides = array<i32>} : memref<16x128xf32, #tpu.memory_space<vmem>>, vector<16x128xf32>,
    return
  }
  func.func @transform_0(%arg0: i32) -> (i32, i32) {
    %c0_i32 = arith.constant 0 : i32
    %c0_i32_0 = arith.constant 0 : i32
    return %arg0, %c0_i32 : i32, i32
  }
  func.func @transform_1(%arg0: i32) -> (i32, i32) {
    %c0_i32 = arith.constant 0 : i32
    %c0_i32_0 = arith.constant 0 : i32
    %c0_i32_1 = arith.constant 0 : i32
    return %c0_i32, %c0_i32_0 : i32, i32
  }
  func.func @transform_2(%arg0: i32) -> (i32, i32) {
    %c0_i32 = arith.constant 0 : i32
    %c0_i32_0 = arith.constant 0 : i32
    return %arg0, %c0_i32 : i32, i32
  }
}

</mosaic_0001>

<llo_original>
// kernel: simple_nn_forward.1
$region0: #{simple_nn_forward.1}
  #allocation0 [shape = 'u32[]', space=smem, size = 0x4, offset = 0x4, fixed_abs, tag = 'smem constant byte address 0x4 - core index']
  #allocation1 [shape = 'u32[144,128]{1,0:T(1,128)}', space=vmem, size = 0x12000, scoped, tag = 'internal scratch']
  %s0 = inlined_call_operand.vmem [shape: f32[16,128], index: 0, kind: input, shape index: {}]
  %s1 = inlined_call_operand.hbm [shape: f32[392,128], index: 1, kind: input, shape index: {}]
  %s2 = inlined_call_operand.vmem [shape: f32[16,128], index: 2, kind: output, shape index: {}]
  %s3 = sld [smem:[#allocation0]]
  $region22: #{simple_nn_forward.1} parent=0
    _
  %s5 = ssub.s32 1, %s3
  %s6 = scalar_select 0, %s5, %s3
  $region1: #{simple_nn_forward.1} parent=0
    #allocation2 [shape = 'u8[200704]{0}', space=vmem, size = 0x31000, scoped, tag = 'input window, operand 1, single buffered']
    #allocation3 [shape = 's32[1]{0}', space=sflag, size = 0x4, scoped, tag = 'scoped memory for simple_nn_forward.1']
    %7 = vsyncpa [#allocation3], 0
    // Predicated region
    $region2: #{simple_nn_forward.1} parent=1 // pred_check
      _
    $region3: #{simple_nn_forward.1} parent=1 // pred_check_branch
      %9 = sbr.rel (0) target = $region5
    $region4: #{simple_nn_forward.1} parent=1 // pred_region
      _
    $region5: #{simple_nn_forward.1} parent=1 // pred_fallthru
      _
    // Predicated region
    $region6: #{simple_nn_forward.1} parent=1 // pred_check
      _
    $region7: #{simple_nn_forward.1} parent=1 // pred_check_branch
      %11 = sbr.rel (0) target = $region9
    $region8: #{simple_nn_forward.1} parent=1 // pred_region
      %s13 = ssub.s32 6272, 6272
      %14 = vsyncadd [#allocation3], %s13
      %s15 = sshll.u32 [#allocation2], 4
      %s16 = int_to_ptr.vmem [resolvable:$true] %s15
      %21 = dma.hbm_to_vmem [thread:$0]  %s1, 6272, %s16, [#allocation3], 128, 128, 8
    $region9: #{simple_nn_forward.1} parent=1 // pred_fallthru
      _
    // Predicated region
    $region10: #{simple_nn_forward.1} parent=1 // pred_check
      _
    $region11: #{simple_nn_forward.1} parent=1 // pred_check_branch
      %23 = sbr.rel (0) target = $region13
    $region12: #{simple_nn_forward.1} parent=1 // pred_region
      %24 = dma.done [#allocation3], 6272
    $region13: #{simple_nn_forward.1} parent=1 // pred_fallthru
      _
    %v25 = vld [vmem:[%s0] sm:$0xff]
    %v26 = vld [vmem:[%s0 + $0x8] sm:$0xff]
    %v27 = vld [vmem:[#allocation2] sm:$0xff]
    %v28 = vld [vmem:[#allocation2 + $0x8] sm:$0xff]
    %v29 = vld [vmem:[#allocation2 + $0x10] sm:$0xff]
    %v30 = vld [vmem:[#allocation2 + $0x18] sm:$0xff]
    %v31 = vld [vmem:[#allocation2 + $0x20] sm:$0xff]
    %v32 = vld [vmem:[#allocation2 + $0x28] sm:$0xff]
    %v33 = vld [vmem:[#allocation2 + $0x30] sm:$0xff]
    %v34 = vld [vmem:[#allocation2 + $0x38] sm:$0xff]
    %v35 = vld [vmem:[#allocation2 + $0x40] sm:$0xff]
    %v36 = vld [vmem:[#allocation2 + $0x48] sm:$0xff]
    %v37 = vld [vmem:[#allocation2 + $0x50] sm:$0xff]
    %v38 = vld [vmem:[#allocation2 + $0x58] sm:$0xff]
    %v39 = vld [vmem:[#allocation2 + $0x60] sm:$0xff]
    %v40 = vld [vmem:[#allocation2 + $0x68] sm:$0xff]
    %v41 = vld [vmem:[#allocation2 + $0x70] sm:$0xff]
    %v42 = vld [vmem:[#allocation2 + $0x78] sm:$0xff]
    %v43 = vld [vmem:[#allocation2 + $0x80] sm:$0xff]
    %v44 = vld [vmem:[#allocation2 + $0x88] sm:$0xff]
    %v45 = vld [vmem:[#allocation2 + $0x90] sm:$0xff]
    %v46 = vld [vmem:[#allocation2 + $0x98] sm:$0xff]
    %v47 = vld [vmem:[#allocation2 + $0xa0] sm:$0xff]
    %v48 = vld [vmem:[#allocation2 + $0xa8] sm:$0xff]
    %v49 = vld [vmem:[#allocation2 + $0xb0] sm:$0xff]
    %v50 = vld [vmem:[#allocation2 + $0xb8] sm:$0xff]
    %v51 = vld [vmem:[#allocation2 + $0xc0] sm:$0xff]
    %v52 = vld [vmem:[#allocation2 + $0xc8] sm:$0xff]
    %v53 = vld [vmem:[#allocation2 + $0xd0] sm:$0xff]
    %v54 = vld [vmem:[#allocation2 + $0xd8] sm:$0xff]
    %v55 = vld [vmem:[#allocation2 + $0xe0] sm:$0xff]
    %v56 = vld [vmem:[#allocation2 + $0xe8] sm:$0xff]
    %v57 = vld [vmem:[#allocation2 + $0xf0] sm:$0xff]
    %v58 = vld [vmem:[#allocation2 + $0xf8] sm:$0xff]
    %v59 = vld [vmem:[#allocation2 + $0x100] sm:$0xff]
    %v60 = vld [vmem:[#allocation2 + $0x108] sm:$0xff]
    %v61 = vld [vmem:[#allocation2 + $0x110] sm:$0xff]
    %v62 = vld [vmem:[#allocation2 + $0x118] sm:$0xff]
    %v63 = vld [vmem:[#allocation2 + $0x120] sm:$0xff]
    %v64 = vld [vmem:[#allocation2 + $0x128] sm:$0xff]
    %v65 = vld [vmem:[#allocation2 + $0x130] sm:$0xff]
    %v66 = vld [vmem:[#allocation2 + $0x138] sm:$0xff]
    %v67 = vld [vmem:[#allocation2 + $0x140] sm:$0xff]
    %v68 = vld [vmem:[#allocation2 + $0x148] sm:$0xff]
    %v69 = vld [vmem:[#allocation2 + $0x150] sm:$0xff]
    %v70 = vld [vmem:[#allocation2 + $0x158] sm:$0xff]
    %v71 = vld [vmem:[#allocation2 + $0x160] sm:$0xff]
    %v72 = vld [vmem:[#allocation2 + $0x168] sm:$0xff]
    %v73 = vld [vmem:[#allocation2 + $0x170] sm:$0xff]
    %v74 = vld [vmem:[#allocation2 + $0x178] sm:$0xff]
    %v75 = vld [vmem:[#allocation2 + $0x180] sm:$0x1]
    %v76 = vld [vmem:[#allocation2 + $0x181] sm:$0x1]
    %v77 = vld [vmem:[#allocation2 + $0x182] sm:$0x1]
    %v78 = vlaneseq
    %v79 = vshrl.u32 %v78, 7
    %v80 = vsub.s32 0, %v79
    %v81 = vrot.slane %v75, %v80
    %82 = vmatprep.subr.mxu0 0.0
    %83 = vmatpush1.msra.mxu0 %v42
    %84 = vmatprep.subr.mxu0 0.0
    %85 = vmatpush1.msra.mxu0 %v41
    %86 = vmatprep.subr.mxu0 0.0
    %87 = vmatpush1.msra.mxu0 %v40
    %88 = vmatprep.subr.mxu0 0.0
    %89 = vmatpush1.msra.mxu0 %v39
    %90 = vmatprep.subr.mxu0 0.0
    %91 = vmatpush1.msra.mxu0 %v38
    %92 = vmatprep.subr.mxu0 0.0
    %93 = vmatpush1.msra.mxu0 %v37
    %94 = vmatprep.subr.mxu0 0.0
    %95 = vmatpush1.msra.mxu0 %v36
    %96 = vmatprep.subr.mxu0 0.0
    %97 = vmatpush1.msra.mxu0 %v35
    %98 = vmatprep.subr.mxu0 0.0
    %99 = vmatpush1.msra.mxu0 %v34
    %100 = vmatprep.subr.mxu0 0.0
    %101 = vmatpush1.msra.mxu0 %v33
    %102 = vmatprep.subr.mxu0 0.0
    %103 = vmatpush1.msra.mxu0 %v32
    %104 = vmatprep.subr.mxu0 0.0
    %105 = vmatpush1.msra.mxu0 %v31
    %106 = vmatprep.subr.mxu0 0.0
    %107 = vmatpush1.msra.mxu0 %v30
    %108 = vmatprep.subr.mxu0 0.0
    %109 = vmatpush1.msra.mxu0 %v29
    %110 = vmatprep.subr.mxu0 0.0
    %111 = vmatpush1.msra.mxu0 %v28
    %112 = vmatprep.subr.mxu0 0.0
    %113 = vmatpush1.msra.mxu0 %v27
    %114 = vmatprep.subr.mxu0 0.0
    %115 = vmatpush2.msra.mxu0 0.0
    %116 = vmatprep.subr.mxu0 0.0
    %117 = vmatpush2.msra.mxu0 0.0
    %118 = vmatprep.subr.mxu0 0.0
    %119 = vmatpush2.msra.mxu0 0.0
    %120 = vmatprep.subr.mxu0 0.0
    %121 = vmatpush2.msra.mxu0 0.0
    %122 = vmatprep.subr.mxu0 0.0
    %123 = vmatpush2.msra.mxu0 0.0
    %124 = vmatprep.subr.mxu0 0.0
    %125 = vmatpush2.msra.mxu0 0.0
    %126 = vmatprep.subr.mxu0 0.0
    %127 = vmatpush2.msra.mxu0 0.0
    %128 = vmatprep.subr.mxu0 0.0
    %129 = vmatpush2.msra.mxu0 0.0
    %130 = vmatprep.subr.mxu0 0.0
    %131 = vmatpush2.msra.mxu0 0.0
    %132 = vmatprep.subr.mxu0 0.0
    %133 = vmatpush2.msra.mxu0 0.0
    %134 = vmatprep.subr.mxu0 0.0
    %135 = vmatpush2.msra.mxu0 0.0
    %136 = vmatprep.subr.mxu0 0.0
    %137 = vmatpush2.msra.mxu0 0.0
    %138 = vmatprep.subr.mxu0 0.0
    %139 = vmatpush2.msra.mxu0 0.0
    %140 = vmatprep.subr.mxu0 0.0
    %141 = vmatpush2.msra.mxu0 0.0
    %142 = vmatprep.subr.mxu0 0.0
    %143 = vmatpush2.msra.mxu0 0.0
    %144 = vmatprep.subr.mxu0 0.0
    %145 = vmatpush2.msra.mxu0 0.0
    %146 = vmatprep.mubr.f32.mxu0 0.0
    %147 = vmatmul.mubr.f32.gmra.mxu0 %v25
    %v148 = vpop.f32.mrf.mxu0
    %v149 = vadd.f32 %v81, %v148
    %v150 = vpop.f32.mrf.mxu0
    %151 = vmatprep.mubr.f32.mxu0 0.0
    %152 = vmatmul.mubr.f32.gmra.mxu0 %v26
    %v153 = vpop.f32.mrf.mxu0
    %v154 = vadd.f32 %v81, %v153
    %v155 = vpop.f32.mrf.mxu0
    %156 = vdwg.mxu0
    %v157 = vmax.f32 %v149, 0.0
    %v158 = vmax.f32 %v154, 0.0
    %v159 = vlaneseq
    %v160 = vshrl.u32 %v159, 7
    %v161 = vsub.s32 0, %v160
    %v162 = vrot.slane %v76, %v161
    %163 = vmatprep.subr.mxu0 0.0
    %164 = vmatpush1.msra.mxu0 %v58
    %165 = vmatprep.subr.mxu0 0.0
    %166 = vmatpush1.msra.mxu0 %v57
    %167 = vmatprep.subr.mxu0 0.0
    %168 = vmatpush1.msra.mxu0 %v56
    %169 = vmatprep.subr.mxu0 0.0
    %170 = vmatpush1.msra.mxu0 %v55
    %171 = vmatprep.subr.mxu0 0.0
    %172 = vmatpush1.msra.mxu0 %v54
    %173 = vmatprep.subr.mxu0 0.0
    %174 = vmatpush1.msra.mxu0 %v53
    %175 = vmatprep.subr.mxu0 0.0
    %176 = vmatpush1.msra.mxu0 %v52
    %177 = vmatprep.subr.mxu0 0.0
    %178 = vmatpush1.msra.mxu0 %v51
    %179 = vmatprep.subr.mxu0 0.0
    %180 = vmatpush1.msra.mxu0 %v50
    %181 = vmatprep.subr.mxu0 0.0
    %182 = vmatpush1.msra.mxu0 %v49
    %183 = vmatprep.subr.mxu0 0.0
    %184 = vmatpush1.msra.mxu0 %v48
    %185 = vmatprep.subr.mxu0 0.0
    %186 = vmatpush1.msra.mxu0 %v47
    %187 = vmatprep.subr.mxu0 0.0
    %188 = vmatpush1.msra.mxu0 %v46
    %189 = vmatprep.subr.mxu0 0.0
    %190 = vmatpush1.msra.mxu0 %v45
    %191 = vmatprep.subr.mxu0 0.0
    %192 = vmatpush1.msra.mxu0 %v44
    %193 = vmatprep.subr.mxu0 0.0
    %194 = vmatpush1.msra.mxu0 %v43
    %195 = vmatprep.subr.mxu0 0.0
    %196 = vmatpush2.msra.mxu0 0.0
    %197 = vmatprep.subr.mxu0 0.0
    %198 = vmatpush2.msra.mxu0 0.0
    %199 = vmatprep.subr.mxu0 0.0
    %200 = vmatpush2.msra.mxu0 0.0
    %201 = vmatprep.subr.mxu0 0.0
    %202 = vmatpush2.msra.mxu0 0.0
    %203 = vmatprep.subr.mxu0 0.0
    %204 = vmatpush2.msra.mxu0 0.0
    %205 = vmatprep.subr.mxu0 0.0
    %206 = vmatpush2.msra.mxu0 0.0
    %207 = vmatprep.subr.mxu0 0.0
    %208 = vmatpush2.msra.mxu0 0.0
    %209 = vmatprep.subr.mxu0 0.0
    %210 = vmatpush2.msra.mxu0 0.0
    %211 = vmatprep.subr.mxu0 0.0
    %212 = vmatpush2.msra.mxu0 0.0
    %213 = vmatprep.subr.mxu0 0.0
    %214 = vmatpush2.msra.mxu0 0.0
    %215 = vmatprep.subr.mxu0 0.0
    %216 = vmatpush2.msra.mxu0 0.0
    %217 = vmatprep.subr.mxu0 0.0
    %218 = vmatpush2.msra.mxu0 0.0
    %219 = vmatprep.subr.mxu0 0.0
    %220 = vmatpush2.msra.mxu0 0.0
    %221 = vmatprep.subr.mxu0 0.0
    %222 = vmatpush2.msra.mxu0 0.0
    %223 = vmatprep.subr.mxu0 0.0
    %224 = vmatpush2.msra.mxu0 0.0
    %225 = vmatprep.subr.mxu0 0.0
    %226 = vmatpush2.msra.mxu0 0.0
    %227 = vmatprep.mubr.f32.mxu0 0.0
    %228 = vmatmul.mubr.f32.gmra.mxu0 %v157
    %v229 = vpop.f32.mrf.mxu0
    %v230 = vadd.f32 %v162, %v229
    %v231 = vpop.f32.mrf.mxu0
    %232 = vmatprep.mubr.f32.mxu0 0.0
    %233 = vmatmul.mubr.f32.gmra.mxu0 %v158
    %v234 = vpop.f32.mrf.mxu0
    %v235 = vadd.f32 %v162, %v234
    %v236 = vpop.f32.mrf.mxu0
    %237 = vdwg.mxu0
    %v238 = vmax.f32 %v230, 0.0
    %v239 = vmax.f32 %v235, 0.0
    %v240 = vlaneseq
    %v241 = vshrl.u32 %v240, 7
    %v242 = vsub.s32 0, %v241
    %v243 = vrot.slane %v77, %v242
    %244 = vmatprep.subr.mxu0 0.0
    %245 = vmatpush1.msra.mxu0 %v74
    %246 = vmatprep.subr.mxu0 0.0
    %247 = vmatpush1.msra.mxu0 %v73
    %248 = vmatprep.subr.mxu0 0.0
    %249 = vmatpush1.msra.mxu0 %v72
    %250 = vmatprep.subr.mxu0 0.0
    %251 = vmatpush1.msra.mxu0 %v71
    %252 = vmatprep.subr.mxu0 0.0
    %253 = vmatpush1.msra.mxu0 %v70
    %254 = vmatprep.subr.mxu0 0.0
    %255 = vmatpush1.msra.mxu0 %v69
    %256 = vmatprep.subr.mxu0 0.0
    %257 = vmatpush1.msra.mxu0 %v68
    %258 = vmatprep.subr.mxu0 0.0
    %259 = vmatpush1.msra.mxu0 %v67
    %260 = vmatprep.subr.mxu0 0.0
    %261 = vmatpush1.msra.mxu0 %v66
    %262 = vmatprep.subr.mxu0 0.0
    %263 = vmatpush1.msra.mxu0 %v65
    %264 = vmatprep.subr.mxu0 0.0
    %265 = vmatpush1.msra.mxu0 %v64
    %266 = vmatprep.subr.mxu0 0.0
    %267 = vmatpush1.msra.mxu0 %v63
    %268 = vmatprep.subr.mxu0 0.0
    %269 = vmatpush1.msra.mxu0 %v62
    %270 = vmatprep.subr.mxu0 0.0
    %271 = vmatpush1.msra.mxu0 %v61
    %272 = vmatprep.subr.mxu0 0.0
    %273 = vmatpush1.msra.mxu0 %v60
    %274 = vmatprep.subr.mxu0 0.0
    %275 = vmatpush1.msra.mxu0 %v59
    %276 = vmatprep.subr.mxu0 0.0
    %277 = vmatpush2.msra.mxu0 0.0
    %278 = vmatprep.subr.mxu0 0.0
    %279 = vmatpush2.msra.mxu0 0.0
    %280 = vmatprep.subr.mxu0 0.0
    %281 = vmatpush2.msra.mxu0 0.0
    %282 = vmatprep.subr.mxu0 0.0
    %283 = vmatpush2.msra.mxu0 0.0
    %284 = vmatprep.subr.mxu0 0.0
    %285 = vmatpush2.msra.mxu0 0.0
    %286 = vmatprep.subr.mxu0 0.0
    %287 = vmatpush2.msra.mxu0 0.0
    %288 = vmatprep.subr.mxu0 0.0
    %289 = vmatpush2.msra.mxu0 0.0
    %290 = vmatprep.subr.mxu0 0.0
    %291 = vmatpush2.msra.mxu0 0.0
    %292 = vmatprep.subr.mxu0 0.0
    %293 = vmatpush2.msra.mxu0 0.0
    %294 = vmatprep.subr.mxu0 0.0
    %295 = vmatpush2.msra.mxu0 0.0
    %296 = vmatprep.subr.mxu0 0.0
    %297 = vmatpush2.msra.mxu0 0.0
    %298 = vmatprep.subr.mxu0 0.0
    %299 = vmatpush2.msra.mxu0 0.0
    %300 = vmatprep.subr.mxu0 0.0
    %301 = vmatpush2.msra.mxu0 0.0
    %302 = vmatprep.subr.mxu0 0.0
    %303 = vmatpush2.msra.mxu0 0.0
    %304 = vmatprep.subr.mxu0 0.0
    %305 = vmatpush2.msra.mxu0 0.0
    %306 = vmatprep.subr.mxu0 0.0
    %307 = vmatpush2.msra.mxu0 0.0
    %308 = vmatprep.mubr.f32.mxu0 0.0
    %309 = vmatmul.mubr.f32.gmra.mxu0 %v238
    %v310 = vpop.f32.mrf.mxu0
    %v311 = vadd.f32 %v243, %v310
    %v312 = vpop.f32.mrf.mxu0
    %313 = vmatprep.mubr.f32.mxu0 0.0
    %314 = vmatmul.mubr.f32.gmra.mxu0 %v239
    %v315 = vpop.f32.mrf.mxu0
    %v316 = vadd.f32 %v243, %v315
    %v317 = vpop.f32.mrf.mxu0
    %318 = vdwg.mxu0
    %319 = vst [vmem:[%s2] sm:$0xff] %v311
    %320 = vst [vmem:[%s2 + $0x8] sm:$0xff] %v316
    // Predicated region
    $region14: #{simple_nn_forward.1} parent=1 // pred_check
      _
    $region15: #{simple_nn_forward.1} parent=1 // pred_check_branch
      %322 = sbr.rel (0) target = $region17
    $region16: #{simple_nn_forward.1} parent=1 // pred_region
      _
    $region17: #{simple_nn_forward.1} parent=1 // pred_fallthru
      _
    // Predicated region
    $region18: #{simple_nn_forward.1} parent=1 // pred_check
      _
    $region19: #{simple_nn_forward.1} parent=1 // pred_check_branch
      %324 = sbr.rel (0) target = $region21
    $region20: #{simple_nn_forward.1} parent=1 // pred_region
      _
    $region21: #{simple_nn_forward.1} parent=1 // pred_fallthru
      _
    %325 = vsyncpa [#allocation3], 1

</llo_original>
